<compile_context>
chip_gen: v5e
topology: v5e:2x2
jax: 0.10.0
libtpu: 0.0.40
codegen_flags: <defaults>
</compile_context>

<pallas_src>
import functools

import jax
import jax.numpy as jnp
from jax.experimental import pallas as pl
from jax.experimental.pallas import tpu as pltpu

D = 128             # per-stream feature dim (Linear(256,128)  =>  2*D = 256)
S = 6               # number of social streams x1..x6
DENSE = 128
PRE_HORIZON = 10
LEAKY_SLOPE = 0.01  # nn.LeakyReLU default
MAX_TILE = 512      # batch tile: fits default scoped VMEM on v5e/v6e/v7x


def _leaky(z):
    # max(z, a*z) == leaky_relu(z) for 0 < a < 1
    return jnp.maximum(z, LEAKY_SLOPE * z)


# ------------------------------------------------------------------ kernel ---
def _forward_attention_kernel(x_ref, x1_ref, x2_ref, x3_ref, x4_ref, x5_ref,
                              x6_ref,
                              wx_ref, bm1_ref, wm1b_ref, wm2_ref, bm2_ref,
                              wl1a_ref, bl1_ref, wl3_ref, bl3_ref,
                              cc2_ref, cc3_ref, att_ref):
    """One batch tile of the full Forward_attention forward.

    x_ref, x*_ref: (TB, D)    ego ("vocal") + six social streams
    wx:   (D, 2*DENSE)        [wm1a | wl1b]  (shared-LHS fused weights for x)
    bm1:  (1, DENSE)          model[0] bias
    wm1b: (D, DENSE)          model[0] weight^T, social half
    wm2:  (1, DENSE), bm2: (1,1)   model[2] Linear(128,1)
    wl1a: (D, DENSE), bl1: (1, DENSE)   layer1 weight^T aggregation half + bias
    wl3:  (DENSE, DENSE)      layer3 weight^T zero-padded to 128 lanes
    bl3:  (1, DENSE)          layer3 bias zero-padded
    cc2_ref: (TB, DENSE)      LeakyReLU(layer1(cc))
    cc3_ref: (TB, DENSE)      layer3(cc2)  (first 10 lanes valid)
    att_ref: (TB, S)          softmax attention scores
    """
    x = x_ref[...]                                     # (TB, D)
    tb = x.shape[0]

    # Stack the 6 social streams along the sublane (batch) axis so the whole
    # attention-MLP first layer is ONE MXU dot: (6*TB, D) @ (D, 128).
    xs = jnp.concatenate([x1_ref[...], x2_ref[...], x3_ref[...],
                          x4_ref[...], x5_ref[...], x6_ref[...]],
                         axis=0)                       # (S*TB, D)

    # Shared-LHS fused dot: x @ [wm1a | wl1b]  ->  vocal half of the attention
    # MLP (reused by all 6 streams) AND the x-half of layer1.
    vx_full = jnp.dot(x, wx_ref[...],
                      preferred_element_type=jnp.float32)   # (TB, 2*DENSE)
    vx_m = vx_full[:, :DENSE] + bm1_ref[...]           # (TB, 128)
    x_l1 = vx_full[:, DENSE:]                          # (TB, 128)

    # Attention-MLP first layer over all streams at once.
    hs = jnp.dot(xs, wm1b_ref[...],
                 preferred_element_type=jnp.float32)   # (S*TB, 128)
    hs = _leaky(hs.reshape(S, tb, DENSE) + vx_m[None, :, :])   # (S, TB, 128)

    # Linear(128, 1) as a single cross-lane (XLU) reduction, then LeakyReLU.
    scores = jnp.sum(hs * wm2_ref[...], axis=-1, keepdims=True) + bm2_ref[...]
    scores = _leaky(scores)                            # (S, TB, 1)

    # Softmax over the 6 social streams (dim=1 of the PyTorch module).
    m = jnp.max(scores, axis=0, keepdims=True)
    e = jnp.exp(scores - m)
    att = e / jnp.sum(e, axis=0, keepdims=True)        # (S, TB, 1)

    # Attention-weighted aggregation of the social streams.
    agg = jnp.sum(att * xs.reshape(S, tb, DENSE), axis=0)      # (TB, 128)

    # Head: layer1 on cat([aggregation, x]) via pre-split weights, leaky, layer3.
    cc1 = (jnp.dot(agg, wl1a_ref[...], preferred_element_type=jnp.float32)
           + x_l1 + bl1_ref[...])                      # (TB, 128)
    cc2 = _leaky(cc1)
    cc3 = (jnp.dot(cc2, wl3_ref[...], preferred_element_type=jnp.float32)
           + bl3_ref[...])                             # (TB, 128), lanes 10.. = 0

    cc2_ref[...] = cc2.astype(cc2_ref.dtype)
    cc3_ref[...] = cc3.astype(cc3_ref.dtype)
    att_ref[...] = jnp.concatenate([att[j] for j in range(S)],
                                   axis=-1).astype(att_ref.dtype)   # (TB, S)


def _zero_map(nd, i):
    return (0,) * nd


def _resident_spec(shape):
    """Full-array block with a constant index map (stays resident in VMEM)."""
    return pl.BlockSpec(shape, functools.partial(_zero_map, len(shape)))


# ------------------------------------------------------------ weight prep ---
def prepare_params(params):
    """One-time weight preparation (hoisted out of the per-call hot path)."""
    wm1, bm1 = params["model_l1"]     # (128, 256), (128,)
    wm2, bm2 = params["model_l2"]     # (1, 128),  (1,)
    wl1, bl1 = params["layer1"]       # (128, 256), (128,)
    wl3, bl3 = params["layer3"]       # (10, 128),  (10,)
    f32 = jnp.float32

    wm1a = wm1[:, :D].T.astype(f32)   # (D, 128) vocal half of model[0]
    wm1b = wm1[:, D:].T.astype(f32)   # (D, 128) social half of model[0]
    wl1a = wl1[:, :D].T.astype(f32)   # (D, 128) aggregation half of layer1
    wl1b = wl1[:, D:].T.astype(f32)   # (D, 128) x half of layer1

    wx = jnp.concatenate([wm1a, wl1b], axis=1)         # (D, 256) shared-LHS fuse

    wl3_pad = jnp.zeros((DENSE, DENSE), f32).at[:, :PRE_HORIZON].set(
        wl3.T.astype(f32))
    bl3_pad = jnp.zeros((1, DENSE), f32).at[0, :PRE_HORIZON].set(
        bl3.astype(f32))

    return {
        "wx": wx,
        "bm1": bm1.reshape(1, DENSE).astype(f32),
        "wm1b": wm1b,
        "wm2": wm2.reshape(1, DENSE).astype(f32),
        "bm2": bm2.reshape(1, 1).astype(f32),
        "wl1a": wl1a,
        "bl1": bl1.reshape(1, DENSE).astype(f32),
        "wl3": wl3_pad,
        "bl3": bl3_pad,
    }


# ----------------------------------------------------------------- wrapper ---
@jax.jit
def forward_attention(prepped, x, x1, x2, x3, x4, x5, x6):
    """Returns (cc2 (B,128), cc3 (B,10), attention_score (B,1,6))."""
    B = x.shape[0]
    if B <= MAX_TILE:
        TB = max(8, ((B + 7) // 8) * 8)        # single tile, sublane-aligned
    else:
        TB = MAX_TILE                          # multiple of 128 => lane-aligned
    B_pad = ((B + TB - 1) // TB) * TB
    pad = B_pad - B

    def _prep(a):
        a = a.astype(jnp.float32)
        return jnp.pad(a, ((0, pad), (0, 0))) if pad else a

    data = tuple(_prep(a) for a in (x, x1, x2, x3, x4, x5, x6))
    weights = (prepped["wx"], prepped["bm1"], prepped["wm1b"], prepped["wm2"],
               prepped["bm2"], prepped["wl1a"], prepped["bl1"],
               prepped["wl3"], prepped["bl3"])

    batch_spec = pl.BlockSpec((TB, D), lambda i: (i, 0))
    in_specs = [batch_spec] * len(data) + [_resident_spec(w.shape)
                                           for w in weights]

    out_shapes = (jax.ShapeDtypeStruct((B_pad, DENSE), jnp.float32),
                  jax.ShapeDtypeStruct((B_pad, DENSE), jnp.float32),
                  jax.ShapeDtypeStruct((B_pad, S), jnp.float32))
    out_specs = (pl.BlockSpec((TB, DENSE), lambda i: (i, 0)),
                 pl.BlockSpec((TB, DENSE), lambda i: (i, 0)),
                 pl.BlockSpec((TB, S), lambda i: (i, 0)))

    cc2, cc3_pad, att = pl.pallas_call(
        _forward_attention_kernel,
        out_shape=out_shapes,
        grid=(B_pad // TB,),
        in_specs=in_specs,
        out_specs=out_specs,
        compiler_params=pltpu.CompilerParams(
            dimension_semantics=("parallel",),      # shards tiles on v7x 2-TC
            vmem_limit_bytes=32 * 1024 * 1024),     # headroom on v5e (16 MiB default)
    )(*data, *weights)

    cc2 = cc2[:B]
    cc3 = cc3_pad[:B, :PRE_HORIZON]
    attention_score = att[:B].reshape(B, 1, S)     # matches transposed (B,1,6)
    return cc2, cc3, attention_score


# -------------------------------------------------------------- parameters ---
def init_params(key):
    def linear_init(k, out_f, in_f):
        bound = 1.0 / jnp.sqrt(jnp.float32(in_f))
        wk, bk = jax.random.split(k)
        w = jax.random.uniform(wk, (out_f, in_f), jnp.float32, -bound, bound)
        b = jax.random.uniform(bk, (out_f,), jnp.float32, -bound, bound)
        return w, b

    keys = jax.random.split(key, 4)
    return {
        "model_l1": linear_init(keys[0], 128, 2 * D),
        "model_l2": linear_init(keys[1], 1, 128),
        "layer1":   linear_init(keys[2], 128, 2 * D),
        "layer3":   linear_init(keys[3], PRE_HORIZON, 128),
    }


# --------------------------------------------------------- pure-JAX reference
def _leaky_ref(z):
    return jnp.where(z >= 0, z, LEAKY_SLOPE * z)


def _ref_forward(params, x, xs_list):
    wm1, bm1 = params["model_l1"]
    wm2, bm2 = params["model_l2"]
    wl1, bl1 = params["layer1"]
    wl3, bl3 = params["layer3"]

    x_social = jnp.stack(xs_list, axis=1)                       # (B, 6, D)
    vocal = jnp.repeat(x[:, None, :], S, axis=1)                # (B, 6, D)
    xf = jnp.concatenate([vocal, x_social], axis=2)             # (B, 6, 2D)
    h = _leaky_ref(xf @ wm1.T + bm1)
    s = _leaky_ref(h @ wm2.T + bm2)                             # (B, 6, 1)
    a = jax.nn.softmax(s, axis=1)                               # (B, 6, 1)
    a_t = jnp.transpose(a, (0, 2, 1))                           # (B, 1, 6)
    agg = jnp.matmul(a_t, x_social)[:, 0, :]                    # (B, D)
    cc = jnp.concatenate([agg, x], axis=1)                      # (B, 2D)
    cc2 = _leaky_ref(cc @ wl1.T + bl1)
    cc3 = cc2 @ wl3.T + bl3
    return cc2, cc3, a_t


def _check(params, prepped, key, B):
    xkeys = jax.random.split(key, 7)
    x = jax.random.normal(xkeys[0], (B, D), jnp.float32)
    xs_list = [jax.random.normal(xkeys[i + 1], (B, D), jnp.float32)
               for i in range(S)]

    cc2, cc3, att = forward_attention(params_prepped := prepped, x, *xs_list)
    cc2, cc3, att = jax.block_until_ready((cc2, cc3, att))

    r_cc2, r_cc3, r_att = _ref_forward(params, x, xs_list)
    assert cc2.shape == (B, DENSE)
    assert cc3.shape == (B, PRE_HORIZON)
    assert att.shape == (B, 1, S)
    assert jnp.max(jnp.abs(cc2 - r_cc2)) < 1e-4, "cc2 mismatch vs reference"
    assert jnp.max(jnp.abs(cc3 - r_cc3)) < 1e-4, "cc3 mismatch vs reference"
    assert jnp.max(jnp.abs(att - r_att)) < 1e-5, "attention mismatch vs reference"


# -------------------------------------------------------------------- main ---
if __name__ == "__main__":
    key = jax.random.PRNGKey(0)
    pkey, dkey1, dkey2 = jax.random.split(key, 3)
    params = init_params(pkey)
    prepped = prepare_params(params)

    # Small-batch check (single tile).
    _check(params, prepped, dkey1, B=2)
    # Larger batch exercising the batch-tiled grid (grid > 1, "parallel" axis).
    _check(params, prepped, dkey2, B=700)

    print("KERNEL_OK")
</pallas_src>

<mosaic_0001>
module attributes {stable_mosaic.version = 11 : i64} {
  func.func @_forward_attention_kernel(%arg0: i32, %arg1: memref<8x128xf32, #tpu.memory_space<vmem>>, %arg2: memref<8x128xf32, #tpu.memory_space<vmem>>, %arg3: memref<8x128xf32, #tpu.memory_space<vmem>>, %arg4: memref<8x128xf32, #tpu.memory_space<vmem>>, %arg5: memref<8x128xf32, #tpu.memory_space<vmem>>, %arg6: memref<8x128xf32, #tpu.memory_space<vmem>>, %arg7: memref<8x128xf32, #tpu.memory_space<vmem>>, %arg8: memref<128x256xf32, #tpu.memory_space<vmem>>, %arg9: memref<1x128xf32, #tpu.memory_space<vmem>>, %arg10: memref<128x128xf32, #tpu.memory_space<vmem>>, %arg11: memref<1x128xf32, #tpu.memory_space<vmem>>, %arg12: memref<1x1xf32, #tpu.memory_space<vmem>>, %arg13: memref<128x128xf32, #tpu.memory_space<vmem>>, %arg14: memref<1x128xf32, #tpu.memory_space<vmem>>, %arg15: memref<128x128xf32, #tpu.memory_space<vmem>>, %arg16: memref<1x128xf32, #tpu.memory_space<vmem>>, %arg17: memref<8x128xf32, #tpu.memory_space<vmem>>, %arg18: memref<8x128xf32, #tpu.memory_space<vmem>>, %arg19: memref<8x6xf32, #tpu.memory_space<vmem>>) attributes {dimension_semantics = [#tpu.dimension_semantics<parallel>], iteration_bounds = array<i64: 1>, scalar_prefetch = 0 : i64, scratch_operands = 0 : i64, tpu.core_type = #tpu.core_type<tc>, window_params = [{transform_indices = @transform_0, window_bounds = array<i64: 8, 128>}, {transform_indices = @transform_1, window_bounds = array<i64: 8, 128>}, {transform_indices = @transform_2, window_bounds = array<i64: 8, 128>}, {transform_indices = @transform_3, window_bounds = array<i64: 8, 128>}, {transform_indices = @transform_4, window_bounds = array<i64: 8, 128>}, {transform_indices = @transform_5, window_bounds = array<i64: 8, 128>}, {transform_indices = @transform_6, window_bounds = array<i64: 8, 128>}, {pipeline_mode = #tpu.pipeline_mode<synchronous>, transform_indices = @transform_7, window_bounds = array<i64: 128, 256>}, {pipeline_mode = #tpu.pipeline_mode<synchronous>, transform_indices = @transform_8, window_bounds = array<i64: 1, 128>}, {pipeline_mode = #tpu.pipeline_mode<synchronous>, transform_indices = @transform_9, window_bounds = array<i64: 128, 128>}, {pipeline_mode = #tpu.pipeline_mode<synchronous>, transform_indices = @transform_10, window_bounds = array<i64: 1, 128>}, {pipeline_mode = #tpu.pipeline_mode<synchronous>, transform_indices = @transform_11, window_bounds = array<i64: 1, 1>}, {pipeline_mode = #tpu.pipeline_mode<synchronous>, transform_indices = @transform_12, window_bounds = array<i64: 128, 128>}, {pipeline_mode = #tpu.pipeline_mode<synchronous>, transform_indices = @transform_13, window_bounds = array<i64: 1, 128>}, {pipeline_mode = #tpu.pipeline_mode<synchronous>, transform_indices = @transform_14, window_bounds = array<i64: 128, 128>}, {pipeline_mode = #tpu.pipeline_mode<synchronous>, transform_indices = @transform_15, window_bounds = array<i64: 1, 128>}, {transform_indices = @transform_16, window_bounds = array<i64: 8, 128>}, {transform_indices = @transform_17, window_bounds = array<i64: 8, 128>}, {transform_indices = @transform_18, window_bounds = array<i64: 8, 6>}]} {
    %c0 = arith.constant 0 : index
    %c0_0 = arith.constant 0 : index
    %0 = vector.load %arg1[%c0, %c0_0] : memref<8x128xf32, #tpu.memory_space<vmem>>, vector<8x128xf32>
    %c0_1 = arith.constant 0 : index
    %c0_2 = arith.constant 0 : index
    %1 = vector.load %arg2[%c0_1, %c0_2] : memref<8x128xf32, #tpu.memory_space<vmem>>, vector<8x128xf32>
    %c0_3 = arith.constant 0 : index
    %c0_4 = arith.constant 0 : index
    %2 = vector.load %arg3[%c0_3, %c0_4] : memref<8x128xf32, #tpu.memory_space<vmem>>, vector<8x128xf32>
    %c0_5 = arith.constant 0 : index
    %c0_6 = arith.constant 0 : index
    %3 = vector.load %arg4[%c0_5, %c0_6] : memref<8x128xf32, #tpu.memory_space<vmem>>, vector<8x128xf32>
    %c0_7 = arith.constant 0 : index
    %c0_8 = arith.constant 0 : index
    %4 = vector.load %arg5[%c0_7, %c0_8] : memref<8x128xf32, #tpu.memory_space<vmem>>, vector<8x128xf32>
    %c0_9 = arith.constant 0 : index
    %c0_10 = arith.constant 0 : index
    %5 = vector.load %arg6[%c0_9, %c0_10] : memref<8x128xf32, #tpu.memory_space<vmem>>, vector<8x128xf32>
    %c0_11 = arith.constant 0 : index
    %c0_12 = arith.constant 0 : index
    %6 = vector.load %arg7[%c0_11, %c0_12] : memref<8x128xf32, #tpu.memory_space<vmem>>, vector<8x128xf32>
    %7 = tpu.concatenate %1, %2, %3, %4, %5, %6 in 0 : vector<8x128xf32>, vector<8x128xf32>, vector<8x128xf32>, vector<8x128xf32>, vector<8x128xf32>, vector<8x128xf32> -> vector<48x128xf32>
    %c0_13 = arith.constant 0 : index
    %c0_14 = arith.constant 0 : index
    %8 = vector.load %arg8[%c0_13, %c0_14] : memref<128x256xf32, #tpu.memory_space<vmem>>, vector<128x256xf32>
    %cst = arith.constant dense<0.000000e+00> : vector<8x256xf32>
    %9 = tpu.matmul %0, %8, %cst {dimension_numbers = #tpu.dot_dimension_numbers<[1], [0], [0], [1], [0, 0, 1, 1], [], []>} : vector<8x128xf32>, vector<128x256xf32>, vector<8x256xf32> -> vector<8x256xf32>
    %10 = vector.extract_strided_slice %9 {offsets = [0, 0], sizes = [8, 128], strides = [1, 1]} : vector<8x256xf32> to vector<8x128xf32>
    %c0_15 = arith.constant 0 : index
    %c0_16 = arith.constant 0 : index
    %11 = vector.load %arg9[%c0_15, %c0_16] : memref<1x128xf32, #tpu.memory_space<vmem>>, vector<1x128xf32>
    %12 = vector.broadcast %11 : vector<1x128xf32> to vector<8x128xf32>
    %13 = arith.addf %10, %12 : vector<8x128xf32>
    %14 = vector.extract_strided_slice %9 {offsets = [0, 128], sizes = [8, 128], strides = [1, 1]} : vector<8x256xf32> to vector<8x128xf32>
    %c0_17 = arith.constant 0 : index
    %c0_18 = arith.constant 0 : index
    %15 = vector.load %arg10[%c0_17, %c0_18] : memref<128x128xf32, #tpu.memory_space<vmem>>, vector<128x128xf32>
    %cst_19 = arith.constant dense<0.000000e+00> : vector<48x128xf32>
    %16 = tpu.matmul %7, %15, %cst_19 {dimension_numbers = #tpu.dot_dimension_numbers<[1], [0], [0], [1], [0, 0, 1, 1], [], []>} : vector<48x128xf32>, vector<128x128xf32>, vector<48x128xf32> -> vector<48x128xf32>
    %17 = vector.shape_cast %16 : vector<48x128xf32> to vector<6x8x128xf32>
    %18 = vector.shape_cast %13 : vector<8x128xf32> to vector<1x8x128xf32>
    %19 = vector.broadcast %18 : vector<1x8x128xf32> to vector<6x8x128xf32>
    %20 = arith.addf %17, %19 : vector<6x8x128xf32>
    %cst_20 = arith.constant 0.00999999977 : f32
    %21 = vector.broadcast %cst_20 : f32 to vector<6x8x128xf32>
    %22 = arith.mulf %21, %20 : vector<6x8x128xf32>
    %23 = arith.maximumf %20, %22 : vector<6x8x128xf32>
    %c0_21 = arith.constant 0 : index
    %c0_22 = arith.constant 0 : index
    %24 = vector.load %arg11[%c0_21, %c0_22] : memref<1x128xf32, #tpu.memory_space<vmem>>, vector<1x128xf32>
    %25 = vector.shape_cast %24 : vector<1x128xf32> to vector<1x1x128xf32>
    %26 = vector.broadcast %25 : vector<1x1x128xf32> to vector<6x8x128xf32>
    %27 = arith.mulf %23, %26 : vector<6x8x128xf32>
    %cst_23 = arith.constant dense<0.000000e+00> : vector<6x8xf32>
    %28 = vector.multi_reduction <add>, %27, %cst_23 [2] : vector<6x8x128xf32> to vector<6x8xf32>
    %29 = vector.shape_cast %28 : vector<6x8xf32> to vector<6x8x1xf32>
    %c0_24 = arith.constant 0 : index
    %c0_25 = arith.constant 0 : index
    %30 = vector.load %arg12[%c0_24, %c0_25] : memref<1x1xf32, #tpu.memory_space<vmem>>, vector<1x1xf32>
    %31 = vector.shape_cast %30 : vector<1x1xf32> to vector<1x1x1xf32>
    %32 = vector.broadcast %31 : vector<1x1x1xf32> to vector<6x8x1xf32>
    %33 = arith.addf %29, %32 : vector<6x8x1xf32>
    %cst_26 = arith.constant 0.00999999977 : f32
    %34 = vector.broadcast %cst_26 : f32 to vector<6x8x1xf32>
    %35 = arith.mulf %34, %33 : vector<6x8x1xf32>
    %36 = arith.maximumf %33, %35 : vector<6x8x1xf32>
    %cst_27 = arith.constant dense<0xFF800000> : vector<8x1xf32>
    %37 = vector.multi_reduction <maximumf>, %36, %cst_27 [0] : vector<6x8x1xf32> to vector<8x1xf32>
    %38 = vector.shape_cast %37 : vector<8x1xf32> to vector<1x8x1xf32>
    %39 = vector.broadcast %38 : vector<1x8x1xf32> to vector<6x8x1xf32>
    %40 = arith.subf %36, %39 : vector<6x8x1xf32>
    %41 = math.exp %40 : vector<6x8x1xf32>
    %cst_28 = arith.constant dense<0.000000e+00> : vector<8x1xf32>
    %42 = vector.multi_reduction <add>, %41, %cst_28 [0] : vector<6x8x1xf32> to vector<8x1xf32>
    %43 = vector.shape_cast %42 : vector<8x1xf32> to vector<1x8x1xf32>
    %44 = vector.broadcast %43 : vector<1x8x1xf32> to vector<6x8x1xf32>
    %45 = arith.divf %41, %44 : vector<6x8x1xf32>
    %46 = vector.shape_cast %7 : vector<48x128xf32> to vector<6x8x128xf32>
    %47 = vector.broadcast %45 : vector<6x8x1xf32> to vector<6x8x128xf32>
    %48 = arith.mulf %47, %46 : vector<6x8x128xf32>
    %cst_29 = arith.constant dense<0.000000e+00> : vector<8x128xf32>
    %49 = vector.multi_reduction <add>, %48, %cst_29 [0] : vector<6x8x128xf32> to vector<8x128xf32>
    %c0_30 = arith.constant 0 : index
    %c0_31 = arith.constant 0 : index
    %50 = vector.load %arg13[%c0_30, %c0_31] : memref<128x128xf32, #tpu.memory_space<vmem>>, vector<128x128xf32>
    %cst_32 = arith.constant dense<0.000000e+00> : vector<8x128xf32>
    %51 = tpu.matmul %49, %50, %cst_32 {dimension_numbers = #tpu.dot_dimension_numbers<[1], [0], [0], [1], [0, 0, 1, 1], [], []>} : vector<8x128xf32>, vector<128x128xf32>, vector<8x128xf32> -> vector<8x128xf32>
    %52 = arith.addf %51, %14 : vector<8x128xf32>
    %c0_33 = arith.constant 0 : index
    %c0_34 = arith.constant 0 : index
    %53 = vector.load %arg14[%c0_33, %c0_34] : memref<1x128xf32, #tpu.memory_space<vmem>>, vector<1x128xf32>
    %54 = vector.broadcast %53 : vector<1x128xf32> to vector<8x128xf32>
    %55 = arith.addf %52, %54 : vector<8x128xf32>
    %cst_35 = arith.constant 0.00999999977 : f32
    %56 = vector.broadcast %cst_35 : f32 to vector<8x128xf32>
    %57 = arith.mulf %56, %55 : vector<8x128xf32>
    %58 = arith.maximumf %55, %57 : vector<8x128xf32>
    %c0_36 = arith.constant 0 : index
    %c0_37 = arith.constant 0 : index
    %59 = vector.load %arg15[%c0_36, %c0_37] : memref<128x128xf32, #tpu.memory_space<vmem>>, vector<128x128xf32>
    %cst_38 = arith.constant dense<0.000000e+00> : vector<8x128xf32>
    %60 = tpu.matmul %58, %59, %cst_38 {dimension_numbers = #tpu.dot_dimension_numbers<[1], [0], [0], [1], [0, 0, 1, 1], [], []>} : vector<8x128xf32>, vector<128x128xf32>, vector<8x128xf32> -> vector<8x128xf32>
    %c0_39 = arith.constant 0 : index
    %c0_40 = arith.constant 0 : index
    %61 = vector.load %arg16[%c0_39, %c0_40] : memref<1x128xf32, #tpu.memory_space<vmem>>, vector<1x128xf32>
    %62 = vector.broadcast %61 : vector<1x128xf32> to vector<8x128xf32>
    %63 = arith.addf %60, %62 : vector<8x128xf32>
    %c0_41 = arith.constant 0 : index
    %c0_42 = arith.constant 0 : index
    %64 = vector.load %arg17[%c0_41, %c0_42] : memref<8x128xf32, #tpu.memory_space<vmem>>, vector<8x128xf32>
    tpu.vector_store %arg17[%c0_41, %c0_42], %58 {strides = array<i32>} : memref<8x128xf32, #tpu.memory_space<vmem>>, vector<8x128xf32>,
    %c0_43 = arith.constant 0 : index
    %c0_44 = arith.constant 0 : index
    %65 = vector.load %arg18[%c0_43, %c0_44] : memref<8x128xf32, #tpu.memory_space<vmem>>, vector<8x128xf32>
    tpu.vector_store %arg18[%c0_43, %c0_44], %63 {strides = array<i32>} : memref<8x128xf32, #tpu.memory_space<vmem>>, vector<8x128xf32>,
    %66 = vector.extract_strided_slice %45 {offsets = [0, 0, 0], sizes = [1, 8, 1], strides = [1, 1, 1]} : vector<6x8x1xf32> to vector<1x8x1xf32>
    %67 = vector.shape_cast %66 : vector<1x8x1xf32> to vector<8x1xf32>
    %68 = vector.extract_strided_slice %45 {offsets = [1, 0, 0], sizes = [1, 8, 1], strides = [1, 1, 1]} : vector<6x8x1xf32> to vector<1x8x1xf32>
    %69 = vector.shape_cast %68 : vector<1x8x1xf32> to vector<8x1xf32>
    %70 = vector.extract_strided_slice %45 {offsets = [2, 0, 0], sizes = [1, 8, 1], strides = [1, 1, 1]} : vector<6x8x1xf32> to vector<1x8x1xf32>
    %71 = vector.shape_cast %70 : vector<1x8x1xf32> to vector<8x1xf32>
    %72 = vector.extract_strided_slice %45 {offsets = [3, 0, 0], sizes = [1, 8, 1], strides = [1, 1, 1]} : vector<6x8x1xf32> to vector<1x8x1xf32>
    %73 = vector.shape_cast %72 : vector<1x8x1xf32> to vector<8x1xf32>
    %74 = vector.extract_strided_slice %45 {offsets = [4, 0, 0], sizes = [1, 8, 1], strides = [1, 1, 1]} : vector<6x8x1xf32> to vector<1x8x1xf32>
    %75 = vector.shape_cast %74 : vector<1x8x1xf32> to vector<8x1xf32>
    %76 = vector.extract_strided_slice %45 {offsets = [5, 0, 0], sizes = [1, 8, 1], strides = [1, 1, 1]} : vector<6x8x1xf32> to vector<1x8x1xf32>
    %77 = vector.shape_cast %76 : vector<1x8x1xf32> to vector<8x1xf32>
    %78 = tpu.concatenate %67, %69, %71, %73, %75, %77 in 1 : vector<8x1xf32>, vector<8x1xf32>, vector<8x1xf32>, vector<8x1xf32>, vector<8x1xf32>, vector<8x1xf32> -> vector<8x6xf32>
    %c0_45 = arith.constant 0 : index
    %c0_46 = arith.constant 0 : index
    %79 = vector.load %arg19[%c0_45, %c0_46] : memref<8x6xf32, #tpu.memory_space<vmem>>, vector<8x6xf32>
    tpu.vector_store %arg19[%c0_45, %c0_46], %78 {strides = array<i32>} : memref<8x6xf32, #tpu.memory_space<vmem>>, vector<8x6xf32>,
    return
  }
  func.func @transform_0(%arg0: i32) -> (i32, i32) {
    %c0_i32 = arith.constant 0 : i32
    %c0_i32_0 = arith.constant 0 : i32
    return %arg0, %c0_i32 : i32, i32
  }
  func.func @transform_1(%arg0: i32) -> (i32, i32) {
    %c0_i32 = arith.constant 0 : i32
    %c0_i32_0 = arith.constant 0 : i32
    return %arg0, %c0_i32 : i32, i32
  }
  func.func @transform_2(%arg0: i32) -> (i32, i32) {
    %c0_i32 = arith.constant 0 : i32
    %c0_i32_0 = arith.constant 0 : i32
    return %arg0, %c0_i32 : i32, i32
  }
  func.func @transform_3(%arg0: i32) -> (i32, i32) {
    %c0_i32 = arith.constant 0 : i32
    %c0_i32_0 = arith.constant 0 : i32
    return %arg0, %c0_i32 : i32, i32
  }
  func.func @transform_4(%arg0: i32) -> (i32, i32) {
    %c0_i32 = arith.constant 0 : i32
    %c0_i32_0 = arith.constant 0 : i32
    return %arg0, %c0_i32 : i32, i32
  }
  func.func @transform_5(%arg0: i32) -> (i32, i32) {
    %c0_i32 = arith.constant 0 : i32
    %c0_i32_0 = arith.constant 0 : i32
    return %arg0, %c0_i32 : i32, i32
  }
  func.func @transform_6(%arg0: i32) -> (i32, i32) {
    %c0_i32 = arith.constant 0 : i32
    %c0_i32_0 = arith.constant 0 : i32
    return %arg0, %c0_i32 : i32, i32
  }
  func.func @transform_7(%arg0: i32) -> (i32, i32) {
    %c0_i32 = arith.constant 0 : i32
    %c0_i32_0 = arith.constant 0 : i32
    %c0_i32_1 = arith.constant 0 : i32
    return %c0_i32, %c0_i32_0 : i32, i32
  }
  func.func @transform_8(%arg0: i32) -> (i32, i32) {
    %c0_i32 = arith.constant 0 : i32
    %c0_i32_0 = arith.constant 0 : i32
    %c0_i32_1 = arith.constant 0 : i32
    return %c0_i32, %c0_i32_0 : i32, i32
  }
  func.func @transform_9(%arg0: i32) -> (i32, i32) {
    %c0_i32 = arith.constant 0 : i32
    %c0_i32_0 = arith.constant 0 : i32
    %c0_i32_1 = arith.constant 0 : i32
    return %c0_i32, %c0_i32_0 : i32, i32
  }
  func.func @transform_10(%arg0: i32) -> (i32, i32) {
    %c0_i32 = arith.constant 0 : i32
    %c0_i32_0 = arith.constant 0 : i32
    %c0_i32_1 = arith.constant 0 : i32
    return %c0_i32, %c0_i32_0 : i32, i32
  }
  func.func @transform_11(%arg0: i32) -> (i32, i32) {
    %c0_i32 = arith.constant 0 : i32
    %c0_i32_0 = arith.constant 0 : i32
    %c0_i32_1 = arith.constant 0 : i32
    return %c0_i32, %c0_i32_0 : i32, i32
  }
  func.func @transform_12(%arg0: i32) -> (i32, i32) {
    %c0_i32 = arith.constant 0 : i32
    %c0_i32_0 = arith.constant 0 : i32
    %c0_i32_1 = arith.constant 0 : i32
    return %c0_i32, %c0_i32_0 : i32, i32
  }
  func.func @transform_13(%arg0: i32) -> (i32, i32) {
    %c0_i32 = arith.constant 0 : i32
    %c0_i32_0 = arith.constant 0 : i32
    %c0_i32_1 = arith.constant 0 : i32
    return %c0_i32, %c0_i32_0 : i32, i32
  }
  func.func @transform_14(%arg0: i32) -> (i32, i32) {
    %c0_i32 = arith.constant 0 : i32
    %c0_i32_0 = arith.constant 0 : i32
    %c0_i32_1 = arith.constant 0 : i32
    return %c0_i32, %c0_i32_0 : i32, i32
  }
  func.func @transform_15(%arg0: i32) -> (i32, i32) {
    %c0_i32 = arith.constant 0 : i32
    %c0_i32_0 = arith.constant 0 : i32
    %c0_i32_1 = arith.constant 0 : i32
    return %c0_i32, %c0_i32_0 : i32, i32
  }
  func.func @transform_16(%arg0: i32) -> (i32, i32) {
    %c0_i32 = arith.constant 0 : i32
    %c0_i32_0 = arith.constant 0 : i32
    return %arg0, %c0_i32 : i32, i32
  }
  func.func @transform_17(%arg0: i32) -> (i32, i32) {
    %c0_i32 = arith.constant 0 : i32
    %c0_i32_0 = arith.constant 0 : i32
    return %arg0, %c0_i32 : i32, i32
  }
  func.func @transform_18(%arg0: i32) -> (i32, i32) {
    %c0_i32 = arith.constant 0 : i32
    %c0_i32_0 = arith.constant 0 : i32
    return %arg0, %c0_i32 : i32, i32
  }
}

</mosaic_0001>

<llo_original>
// kernel: forward_attention.1
$region0: #{forward_attention.1}
  #allocation0 [shape = 'u32[]', space=smem, size = 0x4, offset = 0x4, fixed_abs, tag = 'smem constant byte address 0x4 - core index']
  #allocation1 [shape = 'u32[72,128]{1,0:T(1,128)}', space=vmem, size = 0x9000, scoped, tag = 'internal scratch']
  #allocation2 [shape = 'f32[1,1]{1,0:T(1,128)S(1)}', space=vmem, size = 0x200, scoped, tag = 'scoped memory for forward_attention.1']
  %s0 = inlined_call_operand.vmem [shape: f32[8,128], index: 0, kind: input, shape index: {}]
  %s1 = inlined_call_operand.vmem [shape: f32[8,128], index: 1, kind: input, shape index: {}]
  %s2 = inlined_call_operand.vmem [shape: f32[8,128], index: 2, kind: input, shape index: {}]
  %s3 = inlined_call_operand.vmem [shape: f32[8,128], index: 3, kind: input, shape index: {}]
  %s4 = inlined_call_operand.vmem [shape: f32[8,128], index: 4, kind: input, shape index: {}]
  %s5 = inlined_call_operand.vmem [shape: f32[8,128], index: 5, kind: input, shape index: {}]
  %s6 = inlined_call_operand.vmem [shape: f32[8,128], index: 6, kind: input, shape index: {}]
  %s7 = inlined_call_operand.hbm [shape: f32[128,256], index: 7, kind: input, shape index: {}]
  %s8 = inlined_call_operand.vmem [shape: f32[1,128], index: 8, kind: input, shape index: {}]
  %s9 = inlined_call_operand.hbm [shape: f32[128,128], index: 9, kind: input, shape index: {}]
  %s10 = inlined_call_operand.vmem [shape: f32[1,128], index: 10, kind: input, shape index: {}]
  %s11 = inlined_call_operand.<no memory space> [shape: f32[1,1], index: 11, kind: input, shape index: {}]
  %s12 = inlined_call_operand.hbm [shape: f32[128,128], index: 12, kind: input, shape index: {}]
  %s13 = inlined_call_operand.vmem [shape: f32[1,128], index: 13, kind: input, shape index: {}]
  %s14 = inlined_call_operand.hbm [shape: f32[128,128], index: 14, kind: input, shape index: {}]
  %s15 = inlined_call_operand.vmem [shape: f32[1,128], index: 15, kind: input, shape index: {}]
  %s16 = inlined_call_operand.vmem [shape: f32[8,128], index: 16, kind: output, shape index: {0}]
  %s17 = inlined_call_operand.vmem [shape: f32[8,128], index: 17, kind: output, shape index: {1}]
  %s18 = inlined_call_operand.vmem [shape: f32[8,6], index: 18, kind: output, shape index: {2}]
  %19 = xla_tuple %s16, %s17, %s18
  %s20 = sld [smem:[#allocation0]]
  $region106: #{forward_attention.1} parent=0
    _
  %s22 = ssub.s32 1, %s20
  %s23 = scalar_select 0, %s22, %s20
  %v24 = vstv %s11
  %25 = vst [vmem:[#allocation2] sm:$0x1] %v24
  $region1: #{forward_attention.1} parent=0
    #allocation3 [shape = 'u8[131072]{0}', space=vmem, size = 0x20000, scoped, tag = 'input window, operand 7, single buffered']
    #allocation4 [shape = 's32[1]{0}', space=sflag, size = 0x4, scoped, tag = 'scoped memory for forward_attention.1']
    #allocation5 [shape = 'u8[65536]{0}', space=vmem, size = 0x10000, scoped, tag = 'input window, operand 9, single buffered']
    #allocation6 [shape = 's32[1]{0}', space=sflag, size = 0x4, scoped, tag = 'scoped memory for forward_attention.1']
    #allocation7 [shape = 'u8[65536]{0}', space=vmem, size = 0x10000, scoped, tag = 'input window, operand 12, single buffered']
    #allocation8 [shape = 'u8[65536]{0}', space=vmem, size = 0x10000, scoped, tag = 'input window, operand 14, single buffered']
    #allocation9 [shape = 's32[1]{0}', space=sflag, size = 0x4, scoped, tag = 'scoped memory for forward_attention.1']
    %26 = vsyncpa [#allocation4], 0
    %27 = vsyncpa [#allocation6], 0
    %28 = vsyncpa [#allocation9], 0
    // Predicated region
    $region2: #{forward_attention.1} parent=1 // pred_check
      _
    $region3: #{forward_attention.1} parent=1 // pred_check_branch
      %30 = sbr.rel (0) target = $region5
    $region4: #{forward_attention.1} parent=1 // pred_region
      _
    $region5: #{forward_attention.1} parent=1 // pred_fallthru
      _
    // Predicated region
    $region6: #{forward_attention.1} parent=1 // pred_check
      _
    $region7: #{forward_attention.1} parent=1 // pred_check_branch
      %32 = sbr.rel (0) target = $region9
    $region8: #{forward_attention.1} parent=1 // pred_region
      _
    $region9: #{forward_attention.1} parent=1 // pred_fallthru
      _
    // Predicated region
    $region10: #{forward_attention.1} parent=1 // pred_check
      _
    $region11: #{forward_attention.1} parent=1 // pred_check_branch
      %34 = sbr.rel (0) target = $region13
    $region12: #{forward_attention.1} parent=1 // pred_region
      _
    $region13: #{forward_attention.1} parent=1 // pred_fallthru
      _
    // Predicated region
    $region14: #{forward_attention.1} parent=1 // pred_check
      _
    $region15: #{forward_attention.1} parent=1 // pred_check_branch
      %36 = sbr.rel (0) target = $region17
    $region16: #{forward_attention.1} parent=1 // pred_region
      _
    $region17: #{forward_attention.1} parent=1 // pred_fallthru
      _
    // Predicated region
    $region18: #{forward_attention.1} parent=1 // pred_check
      _
    $region19: #{forward_attention.1} parent=1 // pred_check_branch
      %38 = sbr.rel (0) target = $region21
    $region20: #{forward_attention.1} parent=1 // pred_region
      _
    $region21: #{forward_attention.1} parent=1 // pred_fallthru
      _
    // Predicated region
    $region22: #{forward_attention.1} parent=1 // pred_check
      _
    $region23: #{forward_attention.1} parent=1 // pred_check_branch
      %40 = sbr.rel (0) target = $region25
    $region24: #{forward_attention.1} parent=1 // pred_region
      _
    $region25: #{forward_attention.1} parent=1 // pred_fallthru
      _
    // Predicated region
    $region26: #{forward_attention.1} parent=1 // pred_check
      _
    $region27: #{forward_attention.1} parent=1 // pred_check_branch
      %42 = sbr.rel (0) target = $region29
    $region28: #{forward_attention.1} parent=1 // pred_region
      _
    $region29: #{forward_attention.1} parent=1 // pred_fallthru
      _
    // Predicated region
    $region30: #{forward_attention.1} parent=1 // pred_check
      _
    $region31: #{forward_attention.1} parent=1 // pred_check_branch
      %44 = sbr.rel (0) target = $region33
    $region32: #{forward_attention.1} parent=1 // pred_region
      %46 = vsyncadd [#allocation4], 0
      %s47 = sshll.u32 %s7, 4
      %s48 = int_to_ptr.hbm [resolvable:$true] %s47
      %s49 = sshll.u32 [#allocation3], 4
      %s50 = int_to_ptr.vmem [resolvable:$true] %s49
      %55 = dma.hbm_to_vmem [thread:$0]  %s48, 4096, %s50, [#allocation4], 256, 256, 16
    $region33: #{forward_attention.1} parent=1 // pred_fallthru
      _
    // Predicated region
    $region34: #{forward_attention.1} parent=1 // pred_check
      _
    $region35: #{forward_attention.1} parent=1 // pred_check_branch
      %57 = sbr.rel (0) target = $region37
    $region36: #{forward_attention.1} parent=1 // pred_region
      _
    $region37: #{forward_attention.1} parent=1 // pred_fallthru
      _
    // Predicated region
    $region38: #{forward_attention.1} parent=1 // pred_check
      _
    $region39: #{forward_attention.1} parent=1 // pred_check_branch
      %59 = sbr.rel (0) target = $region41
    $region40: #{forward_attention.1} parent=1 // pred_region
      %61 = vsyncadd [#allocation6], 0
      %s62 = sshll.u32 %s9, 4
      %s63 = int_to_ptr.hbm [resolvable:$true] %s62
      %s64 = sshll.u32 [#allocation5], 4
      %s65 = int_to_ptr.vmem [resolvable:$true] %s64
      %70 = dma.hbm_to_vmem [thread:$0]  %s63, 2048, %s65, [#allocation6], 128, 128, 8
    $region41: #{forward_attention.1} parent=1 // pred_fallthru
      _
    // Predicated region
    $region42: #{forward_attention.1} parent=1 // pred_check
      _
    $region43: #{forward_attention.1} parent=1 // pred_check_branch
      %72 = sbr.rel (0) target = $region45
    $region44: #{forward_attention.1} parent=1 // pred_region
      _
    $region45: #{forward_attention.1} parent=1 // pred_fallthru
      _
    // Predicated region
    $region46: #{forward_attention.1} parent=1 // pred_check
      _
    $region47: #{forward_attention.1} parent=1 // pred_check_branch
      %74 = sbr.rel (0) target = $region49
    $region48: #{forward_attention.1} parent=1 // pred_region
      _
    $region49: #{forward_attention.1} parent=1 // pred_fallthru
      _
    // Predicated region
    $region50: #{forward_attention.1} parent=1 // pred_check
      _
    $region51: #{forward_attention.1} parent=1 // pred_check_branch
      %76 = sbr.rel (0) target = $region53
    $region52: #{forward_attention.1} parent=1 // pred_region
      %78 = vsyncadd [#allocation6], 0
      %s79 = sshll.u32 %s12, 4
      %s80 = int_to_ptr.hbm [resolvable:$true] %s79
      %s81 = sshll.u32 [#allocation7], 4
      %s82 = int_to_ptr.vmem [resolvable:$true] %s81
      %87 = dma.hbm_to_vmem [thread:$0]  %s80, 2048, %s82, [#allocation6], 128, 128, 8
    $region53: #{forward_attention.1} parent=1 // pred_fallthru
      _
    // Predicated region
    $region54: #{forward_attention.1} parent=1 // pred_check
      _
    $region55: #{forward_attention.1} parent=1 // pred_check_branch
      %89 = sbr.rel (0) target = $region57
    $region56: #{forward_attention.1} parent=1 // pred_region
      _
    $region57: #{forward_attention.1} parent=1 // pred_fallthru
      _
    // Predicated region
    $region58: #{forward_attention.1} parent=1 // pred_check
      _
    $region59: #{forward_attention.1} parent=1 // pred_check_branch
      %91 = sbr.rel (0) target = $region61
    $region60: #{forward_attention.1} parent=1 // pred_region
      %93 = vsyncadd [#allocation9], 0
      %s94 = sshll.u32 %s14, 4
      %s95 = int_to_ptr.hbm [resolvable:$true] %s94
      %s96 = sshll.u32 [#allocation8], 4
      %s97 = int_to_ptr.vmem [resolvable:$true] %s96
      %102 = dma.hbm_to_vmem [thread:$0]  %s95, 2048, %s97, [#allocation9], 128, 128, 8
    $region61: #{forward_attention.1} parent=1 // pred_fallthru
      _
    // Predicated region
    $region62: #{forward_attention.1} parent=1 // pred_check
      _
    $region63: #{forward_attention.1} parent=1 // pred_check_branch
      %104 = sbr.rel (0) target = $region65
    $region64: #{forward_attention.1} parent=1 // pred_region
      _
    $region65: #{forward_attention.1} parent=1 // pred_fallthru
      _
    // Predicated region
    $region66: #{forward_attention.1} parent=1 // pred_check
      _
    $region67: #{forward_attention.1} parent=1 // pred_check_branch
      %106 = sbr.rel (0) target = $region69
    $region68: #{forward_attention.1} parent=1 // pred_region
      %108 = dma.done [#allocation4], 4096
    $region69: #{forward_attention.1} parent=1 // pred_fallthru
      _
    // Predicated region
    $region70: #{forward_attention.1} parent=1 // pred_check
      _
    $region71: #{forward_attention.1} parent=1 // pred_check_branch
      %110 = sbr.rel (0) target = $region73
    $region72: #{forward_attention.1} parent=1 // pred_region
      %112 = dma.done [#allocation6], 2048
    $region73: #{forward_attention.1} parent=1 // pred_fallthru
      _
    // Predicated region
    $region74: #{forward_attention.1} parent=1 // pred_check
      _
    $region75: #{forward_attention.1} parent=1 // pred_check_branch
      %114 = sbr.rel (0) target = $region77
    $region76: #{forward_attention.1} parent=1 // pred_region
      %116 = dma.done [#allocation6], 2048
    $region77: #{forward_attention.1} parent=1 // pred_fallthru
      _
    // Predicated region
    $region78: #{forward_attention.1} parent=1 // pred_check
      _
    $region79: #{forward_attention.1} parent=1 // pred_check_branch
      %118 = sbr.rel (0) target = $region81
    $region80: #{forward_attention.1} parent=1 // pred_region
      %120 = dma.done [#allocation9], 2048
    $region81: #{forward_attention.1} parent=1 // pred_fallthru
      _
    %v121 = vld [vmem:[%s0] sm:$0xff]
    %v122 = vld [vmem:[%s1] sm:$0xff]
    %v123 = vld [vmem:[%s2] sm:$0xff]
    %v124 = vld [vmem:[%s3] sm:$0xff]
    %v125 = vld [vmem:[%s4] sm:$0xff]
    %v126 = vld [vmem:[%s5] sm:$0xff]
    %v127 = vld [vmem:[%s6] sm:$0xff]
    %v128 = vld [vmem:[#allocation3] sm:$0xff]
    %v129 = vld [vmem:[#allocation3 + $0x8] sm:$0xff]
    %v130 = vld [vmem:[#allocation3 + $0x10] sm:$0xff]
    %v131 = vld [vmem:[#allocation3 + $0x18] sm:$0xff]
    %v132 = vld [vmem:[#allocation3 + $0x20] sm:$0xff]
    %v133 = vld [vmem:[#allocation3 + $0x28] sm:$0xff]
    %v134 = vld [vmem:[#allocation3 + $0x30] sm:$0xff]
    %v135 = vld [vmem:[#allocation3 + $0x38] sm:$0xff]
    %v136 = vld [vmem:[#allocation3 + $0x40] sm:$0xff]
    %v137 = vld [vmem:[#allocation3 + $0x48] sm:$0xff]
    %v138 = vld [vmem:[#allocation3 + $0x50] sm:$0xff]
    %v139 = vld [vmem:[#allocation3 + $0x58] sm:$0xff]
    %v140 = vld [vmem:[#allocation3 + $0x60] sm:$0xff]
    %v141 = vld [vmem:[#allocation3 + $0x68] sm:$0xff]
    %v142 = vld [vmem:[#allocation3 + $0x70] sm:$0xff]
    %v143 = vld [vmem:[#allocation3 + $0x78] sm:$0xff]
    %v144 = vld [vmem:[#allocation3 + $0x80] sm:$0xff]
    %v145 = vld [vmem:[#allocation3 + $0x88] sm:$0xff]
    %v146 = vld [vmem:[#allocation3 + $0x90] sm:$0xff]
    %v147 = vld [vmem:[#allocation3 + $0x98] sm:$0xff]
    %v148 = vld [vmem:[#allocation3 + $0xa0] sm:$0xff]
    %v149 = vld [vmem:[#allocation3 + $0xa8] sm:$0xff]
    %v150 = vld [vmem:[#allocation3 + $0xb0] sm:$0xff]
    %v151 = vld [vmem:[#allocation3 + $0xb8] sm:$0xff]
    %v152 = vld [vmem:[#allocation3 + $0xc0] sm:$0xff]
    %v153 = vld [vmem:[#allocation3 + $0xc8] sm:$0xff]
    %v154 = vld [vmem:[#allocation3 + $0xd0] sm:$0xff]
    %v155 = vld [vmem:[#allocation3 + $0xd8] sm:$0xff]
    %v156 = vld [vmem:[#allocation3 + $0xe0] sm:$0xff]
    %v157 = vld [vmem:[#allocation3 + $0xe8] sm:$0xff]
    %v158 = vld [vmem:[#allocation3 + $0xf0] sm:$0xff]
    %v159 = vld [vmem:[#allocation3 + $0xf8] sm:$0xff]
    %160 = vmatpush.msra.mxu0 %v158
    %161 = vmatpush.msra.mxu0 %v156
    %162 = vmatpush.msra.mxu0 %v154
    %163 = vmatpush.msra.mxu0 %v152
    %164 = vmatpush.msra.mxu0 %v150
    %165 = vmatpush.msra.mxu0 %v148
    %166 = vmatpush.msra.mxu0 %v146
    %167 = vmatpush.msra.mxu0 %v144
    %168 = vmatpush.msra.mxu0 %v142
    %169 = vmatpush.msra.mxu0 %v140
    %170 = vmatpush.msra.mxu0 %v138
    %171 = vmatpush.msra.mxu0 %v136
    %172 = vmatpush.msra.mxu0 %v134
    %173 = vmatpush.msra.mxu0 %v132
    %174 = vmatpush.msra.mxu0 %v130
    %175 = vmatpush.msra.mxu0 %v128
    %176 = vmatmul.f32.gmra.mxu0 %v121
    %v177 = vpop.f32.mrf.mxu0
    %v178 = vadd.f32 0.0, %v177
    %179 = vdwg.mxu0
    %180 = vmatpush.msra.mxu0 %v159
    %181 = vmatpush.msra.mxu0 %v157
    %182 = vmatpush.msra.mxu0 %v155
    %183 = vmatpush.msra.mxu0 %v153
    %184 = vmatpush.msra.mxu0 %v151
    %185 = vmatpush.msra.mxu0 %v149
    %186 = vmatpush.msra.mxu0 %v147
    %187 = vmatpush.msra.mxu0 %v145
    %188 = vmatpush.msra.mxu0 %v143
    %189 = vmatpush.msra.mxu0 %v141
    %190 = vmatpush.msra.mxu0 %v139
    %191 = vmatpush.msra.mxu0 %v137
    %192 = vmatpush.msra.mxu0 %v135
    %193 = vmatpush.msra.mxu0 %v133
    %194 = vmatpush.msra.mxu0 %v131
    %195 = vmatpush.msra.mxu0 %v129
    %196 = vmatmul.f32.gmra.mxu0 %v121
    %v197 = vpop.f32.mrf.mxu0
    %v198 = vadd.f32 0.0, %v197
    %199 = vdwg.mxu0
    %v200 = vld [vmem:[%s8] sm:$0x1]
    %v202 = vperm.slane %v200, 0
    %v204 = vadd.f32 %v178, %v202
    %v205 = vld [vmem:[#allocation5] sm:$0xff]
    %v206 = vld [vmem:[#allocation5 + $0x8] sm:$0xff]
    %v207 = vld [vmem:[#allocation5 + $0x10] sm:$0xff]
    %v208 = vld [vmem:[#allocation5 + $0x18] sm:$0xff]
    %v209 = vld [vmem:[#allocation5 + $0x20] sm:$0xff]
    %v210 = vld [vmem:[#allocation5 + $0x28] sm:$0xff]
    %v211 = vld [vmem:[#allocation5 + $0x30] sm:$0xff]
    %v212 = vld [vmem:[#allocation5 + $0x38] sm:$0xff]
    %v213 = vld [vmem:[#allocation5 + $0x40] sm:$0xff]
    %v214 = vld [vmem:[#allocation5 + $0x48] sm:$0xff]
    %v215 = vld [vmem:[#allocation5 + $0x50] sm:$0xff]
    %v216 = vld [vmem:[#allocation5 + $0x58] sm:$0xff]
    %v217 = vld [vmem:[#allocation5 + $0x60] sm:$0xff]
    %v218 = vld [vmem:[#allocation5 + $0x68] sm:$0xff]
    %v219 = vld [vmem:[#allocation5 + $0x70] sm:$0xff]
    %v220 = vld [vmem:[#allocation5 + $0x78] sm:$0xff]
    %221 = vmatpush.msra.mxu0 %v220
    %222 = vmatpush.msra.mxu0 %v219
    %223 = vmatpush.msra.mxu0 %v218
    %224 = vmatpush.msra.mxu0 %v217
    %225 = vmatpush.msra.mxu0 %v216
    %226 = vmatpush.msra.mxu0 %v215
    %227 = vmatpush.msra.mxu0 %v214
    %228 = vmatpush.msra.mxu0 %v213
    %229 = vmatpush.msra.mxu0 %v212
    %230 = vmatpush.msra.mxu0 %v211
    %231 = vmatpush.msra.mxu0 %v210
    %232 = vmatpush.msra.mxu0 %v209
    %233 = vmatpush.msra.mxu0 %v208
    %234 = vmatpush.msra.mxu0 %v207
    %235 = vmatpush.msra.mxu0 %v206
    %236 = vmatpush.msra.mxu0 %v205
    %237 = vmatmul.f32.gmra.mxu0 %v122
    %v238 = vpop.f32.mrf.mxu0
    %v239 = vadd.f32 0.0, %v238
    %240 = vmatmul.f32.gmra.mxu0 %v123
    %v241 = vpop.f32.mrf.mxu0
    %v242 = vadd.f32 0.0, %v241
    %243 = vmatmul.f32.gmra.mxu0 %v124
    %v244 = vpop.f32.mrf.mxu0
    %v245 = vadd.f32 0.0, %v244
    %246 = vmatmul.f32.gmra.mxu0 %v125
    %v247 = vpop.f32.mrf.mxu0
    %v248 = vadd.f32 0.0, %v247
    %249 = vmatmul.f32.gmra.mxu0 %v126
    %v250 = vpop.f32.mrf.mxu0
    %v251 = vadd.f32 0.0, %v250
    %252 = vmatmul.f32.gmra.mxu0 %v127
    %v253 = vpop.f32.mrf.mxu0
    %v254 = vadd.f32 0.0, %v253
    %255 = vdwg.mxu0
    %v256 = vadd.f32 %v239, %v204
    %v257 = vadd.f32 %v242, %v204
    %v258 = vadd.f32 %v245, %v204
    %v259 = vadd.f32 %v248, %v204
    %v260 = vadd.f32 %v251, %v204
    %v261 = vadd.f32 %v254, %v204
    %v262 = vmul.f32 %v256, 0.01
    %v263 = vmul.f32 %v257, 0.01
    %v264 = vmul.f32 %v258, 0.01
    %v265 = vmul.f32 %v259, 0.01
    %v266 = vmul.f32 %v260, 0.01
    %v267 = vmul.f32 %v261, 0.01
    %v268 = vmax.f32 %v256, %v262
    %v269 = vmax.f32 %v257, %v263
    %v270 = vmax.f32 %v258, %v264
    %v271 = vmax.f32 %v259, %v265
    %v272 = vmax.f32 %v260, %v266
    %v273 = vmax.f32 %v261, %v267
    %v274 = vld [vmem:[%s10] sm:$0x1]
    %v276 = vperm.slane %v274, 0
    %v278 = vmul.f32 %v268, %v276
    %v279 = vmul.f32 %v269, %v276
    %v280 = vmul.f32 %v270, %v276
    %v281 = vmul.f32 %v271, %v276
    %v282 = vmul.f32 %v272, %v276
    %v283 = vmul.f32 %v273, %v276
    %284 = vadd.xlane.f32.xlu0 %v278
    %v285 = vpop.xlane.xlu0 %284
    %286 = vadd.xlane.f32.xlu0 %v279
    %v287 = vpop.xlane.xlu0 %286
    %288 = vadd.xlane.f32.xlu0 %v280
    %v289 = vpop.xlane.xlu0 %288
    %290 = vadd.xlane.f32.xlu0 %v281
    %v291 = vpop.xlane.xlu0 %290
    %292 = vadd.xlane.f32.xlu0 %v282
    %v293 = vpop.xlane.xlu0 %292
    %294 = vadd.xlane.f32.xlu0 %v283
    %v295 = vpop.xlane.xlu0 %294
    %v296 = vld [vmem:[#allocation2] sm:$0x1]
    %v298 = vperm.slane %v296, 0
    %v300 = vadd.f32 %v285, %v298
    %v301 = vadd.f32 %v287, %v298
    %v302 = vadd.f32 %v289, %v298
    %v303 = vadd.f32 %v291, %v298
    %v304 = vadd.f32 %v293, %v298
    %v305 = vadd.f32 %v295, %v298
    %v306 = vmul.f32 %v300, 0.01
    %v307 = vmul.f32 %v301, 0.01
    %v308 = vmul.f32 %v302, 0.01
    %v309 = vmul.f32 %v303, 0.01
    %v310 = vmul.f32 %v304, 0.01
    %v311 = vmul.f32 %v305, 0.01
    %v312 = vmax.f32 %v300, %v306
    %v313 = vmax.f32 %v301, %v307
    %v314 = vmax.f32 %v302, %v308
    %v315 = vmax.f32 %v303, %v309
    %v316 = vmax.f32 %v304, %v310
    %v317 = vmax.f32 %v305, %v311
    %vm318 = vcmask 7168
    %v319 = vsel %vm318, %v312, -inf
    %v320 = vsel %vm318, %v313, -inf
    %v321 = vsel %vm318, %v314, -inf
    %v322 = vsel %vm318, %v315, -inf
    %v323 = vsel %vm318, %v316, -inf
    %v324 = vmax.f32 %v319, %v323
    %v325 = vsel %vm318, %v317, -inf
    %v326 = vmax.f32 %v320, %v325
    %v327 = vmax.f32 %v324, %v326
    %v328 = vmax.f32 %v321, %v322
    %v329 = vmax.f32 %v327, %v328
    %v330 = vsub.f32 %v312, %v329
    %v331 = vsub.f32 %v313, %v329
    %v332 = vsub.f32 %v314, %v329
    %v333 = vsub.f32 %v315, %v329
    %v334 = vsub.f32 %v316, %v329
    %v335 = vsub.f32 %v317, %v329
    %v336 = vmul.f32 %v330, 1.442695
    %v337 = vpow.pop %v336
    %v338 = vmul.f32 %v331, 1.442695
    %v339 = vpow.pop %v338
    %v340 = vmul.f32 %v332, 1.442695
    %v341 = vpow.pop %v340
    %v342 = vmul.f32 %v333, 1.442695
    %v343 = vpow.pop %v342
    %v344 = vmul.f32 %v334, 1.442695
    %v345 = vpow.pop %v344
    %v346 = vmul.f32 %v335, 1.442695
    %v347 = vpow.pop %v346
    %v348 = vsel %vm318, %v337, 0.0
    %v349 = vsel %vm318, %v339, 0.0
    %v350 = vadd.f32 %v348, %v349
    %v351 = vsel %vm318, %v341, 0.0
    %v352 = vadd.f32 %v350, %v351
    %v353 = vsel %vm318, %v343, 0.0
    %v354 = vadd.f32 %v352, %v353
    %v355 = vsel %vm318, %v345, 0.0
    %v356 = vadd.f32 %v354, %v355
    %v357 = vsel %vm318, %v347, 0.0
    %v358 = vadd.f32 %v356, %v357
    %v359 = vrcp.pop %v358
    %v360 = vmul.f32 %v358, %v359
    %v361 = vsub.f32 1.0, %v360
    %v362 = vmul.f32 %v359, %v361
    %v363 = vadd.f32 %v359, %v362
    %vm364 = vweird.f32 %v358
    %vm365 = vweird.f32 %v359
    %vm366 = vmor %vm364, %vm365
    %v367 = vsel %vm366, %v359, %v363
    %v368 = vand.u32 2147483647, %v358
    %vm369 = vcmp.eq.f32.partialorder %v368, 8.507059e+37
    %v370 = vand.u32 %v358, 2147483648
    %v371 = vor.u32 1.1754944e-38, %v370
    %v372 = vsel %vm369, %v371, %v367
    %v373 = vmul.f32 %v337, %v372
    %v374 = vmul.f32 %v339, %v372
    %v375 = vmul.f32 %v341, %v372
    %v376 = vmul.f32 %v343, %v372
    %v377 = vmul.f32 %v345, %v372
    %v378 = vmul.f32 %v347, %v372
    %380 = vset.pattern.permute.xlu0 0
    %381 = vperm.xlu0 %380, %v373
    %v382 = vpop.permute.xlu0 %381
    %385 = vset.pattern.permute.xlu0 0
    %386 = vperm.xlu0 %385, %v374
    %v387 = vpop.permute.xlu0 %386
    %390 = vset.pattern.permute.xlu0 0
    %391 = vperm.xlu0 %390, %v375
    %v392 = vpop.permute.xlu0 %391
    %395 = vset.pattern.permute.xlu0 0
    %396 = vperm.xlu0 %395, %v376
    %v397 = vpop.permute.xlu0 %396
    %400 = vset.pattern.permute.xlu0 0
    %401 = vperm.xlu0 %400, %v377
    %v402 = vpop.permute.xlu0 %401
    %405 = vset.pattern.permute.xlu0 0
    %406 = vperm.xlu0 %405, %v378
    %v407 = vpop.permute.xlu0 %406
    %v409 = vmul.f32 %v382, %v122
    %v410 = vmul.f32 %v387, %v123
    %v411 = vmul.f32 %v392, %v124
    %v412 = vmul.f32 %v397, %v125
    %v413 = vmul.f32 %v402, %v126
    %v414 = vmul.f32 %v407, %v127
    %v415 = vadd.f32 %v409, %v410
    %v416 = vadd.f32 %v415, %v411
    %v417 = vadd.f32 %v416, %v412
    %v418 = vadd.f32 %v417, %v413
    %v419 = vadd.f32 %v418, %v414
    %v420 = vld [vmem:[#allocation7] sm:$0xff]
    %v421 = vld [vmem:[#allocation7 + $0x8] sm:$0xff]
    %v422 = vld [vmem:[#allocation7 + $0x10] sm:$0xff]
    %v423 = vld [vmem:[#allocation7 + $0x18] sm:$0xff]
    %v424 = vld [vmem:[#allocation7 + $0x20] sm:$0xff]
    %v425 = vld [vmem:[#allocation7 + $0x28] sm:$0xff]
    %v426 = vld [vmem:[#allocation7 + $0x30] sm:$0xff]
    %v427 = vld [vmem:[#allocation7 + $0x38] sm:$0xff]
    %v428 = vld [vmem:[#allocation7 + $0x40] sm:$0xff]
    %v429 = vld [vmem:[#allocation7 + $0x48] sm:$0xff]
    %v430 = vld [vmem:[#allocation7 + $0x50] sm:$0xff]
    %v431 = vld [vmem:[#allocation7 + $0x58] sm:$0xff]
    %v432 = vld [vmem:[#allocation7 + $0x60] sm:$0xff]
    %v433 = vld [vmem:[#allocation7 + $0x68] sm:$0xff]
    %v434 = vld [vmem:[#allocation7 + $0x70] sm:$0xff]
    %v435 = vld [vmem:[#allocation7 + $0x78] sm:$0xff]
    %436 = vmatpush.msra.mxu0 %v435
    %437 = vmatpush.msra.mxu0 %v434
    %438 = vmatpush.msra.mxu0 %v433
    %439 = vmatpush.msra.mxu0 %v432
    %440 = vmatpush.msra.mxu0 %v431
    %441 = vmatpush.msra.mxu0 %v430
    %442 = vmatpush.msra.mxu0 %v429
    %443 = vmatpush.msra.mxu0 %v428
    %444 = vmatpush.msra.mxu0 %v427
    %445 = vmatpush.msra.mxu0 %v426
    %446 = vmatpush.msra.mxu0 %v425
    %447 = vmatpush.msra.mxu0 %v424
    %448 = vmatpush.msra.mxu0 %v423
    %449 = vmatpush.msra.mxu0 %v422
    %450 = vmatpush.msra.mxu0 %v421
    %451 = vmatpush.msra.mxu0 %v420
    %452 = vmatmul.f32.gmra.mxu0 %v419
    %v453 = vpop.f32.mrf.mxu0
    %v454 = vadd.f32 %v198, %v453
    %455 = vdwg.mxu0
    %v456 = vld [vmem:[%s13] sm:$0x1]
    %v458 = vperm.slane %v456, 0
    %v460 = vadd.f32 %v454, %v458
    %v461 = vmul.f32 %v460, 0.01
    %v462 = vmax.f32 %v460, %v461
    %v463 = vld [vmem:[#allocation8] sm:$0xff]
    %v464 = vld [vmem:[#allocation8 + $0x8] sm:$0xff]
    %v465 = vld [vmem:[#allocation8 + $0x10] sm:$0xff]
    %v466 = vld [vmem:[#allocation8 + $0x18] sm:$0xff]
    %v467 = vld [vmem:[#allocation8 + $0x20] sm:$0xff]
    %v468 = vld [vmem:[#allocation8 + $0x28] sm:$0xff]
    %v469 = vld [vmem:[#allocation8 + $0x30] sm:$0xff]
    %v470 = vld [vmem:[#allocation8 + $0x38] sm:$0xff]
    %v471 = vld [vmem:[#allocation8 + $0x40] sm:$0xff]
    %v472 = vld [vmem:[#allocation8 + $0x48] sm:$0xff]
    %v473 = vld [vmem:[#allocation8 + $0x50] sm:$0xff]
    %v474 = vld [vmem:[#allocation8 + $0x58] sm:$0xff]
    %v475 = vld [vmem:[#allocation8 + $0x60] sm:$0xff]
    %v476 = vld [vmem:[#allocation8 + $0x68] sm:$0xff]
    %v477 = vld [vmem:[#allocation8 + $0x70] sm:$0xff]
    %v478 = vld [vmem:[#allocation8 + $0x78] sm:$0xff]
    %v479 = vld [vmem:[%s15] sm:$0x1]
    %v481 = vperm.slane %v479, 0
    %483 = vmatpush.msra.mxu0 %v478
    %484 = vmatpush.msra.mxu0 %v477
    %485 = vmatpush.msra.mxu0 %v476
    %486 = vmatpush.msra.mxu0 %v475
    %487 = vmatpush.msra.mxu0 %v474
    %488 = vmatpush.msra.mxu0 %v473
    %489 = vmatpush.msra.mxu0 %v472
    %490 = vmatpush.msra.mxu0 %v471
    %491 = vmatpush.msra.mxu0 %v470
    %492 = vmatpush.msra.mxu0 %v469
    %493 = vmatpush.msra.mxu0 %v468
    %494 = vmatpush.msra.mxu0 %v467
    %495 = vmatpush.msra.mxu0 %v466
    %496 = vmatpush.msra.mxu0 %v465
    %497 = vmatpush.msra.mxu0 %v464
    %498 = vmatpush.msra.mxu0 %v463
    %499 = vmatmul.f32.gmra.mxu0 %v462
    %v500 = vpop.f32.mrf.mxu0
    %v501 = vadd.f32 %v481, %v500
    %502 = vdwg.mxu0
    %503 = vst [vmem:[%s16] sm:$0xff] %v462
    %504 = vst [vmem:[%s17] sm:$0xff] %v501
    %505 = vrot.lane.b32.xlu0 %v374, 1
    %v506 = vpop.permute.xlu0 %505
    %508 = vrot.lane.b32.xlu0 %v375, 2
    %v509 = vpop.permute.xlu0 %508
    %511 = vrot.lane.b32.xlu0 %v376, 3
    %v512 = vpop.permute.xlu0 %511
    %514 = vrot.lane.b32.xlu0 %v377, 4
    %v515 = vpop.permute.xlu0 %514
    %517 = vrot.lane.b32.xlu0 %v378, 5
    %v518 = vpop.permute.xlu0 %517
    %v520 = vsel %vm318, %v373, %v506
    %vm521 = vcmask 15360
    %v522 = vsel %vm521, %v520, %v509
    %vm523 = vcmask 23552
    %v524 = vsel %vm523, %v522, %v512
    %vm525 = vcmask 31744
    %v526 = vsel %vm525, %v524, %v515
    %vm527 = vcmask 39936
    %v528 = vsel %vm527, %v526, %v518
    %vm529 = vcmask 48128
    %530 = vst.msk [vmem:[%s18] sm:$0xff] %vm529, %v528
    // Predicated region
    $region82: #{forward_attention.1} parent=1 // pred_check
      _
    $region83: #{forward_attention.1} parent=1 // pred_check_branch
      %532 = sbr.rel (0) target = $region85
    $region84: #{forward_attention.1} parent=1 // pred_region
      _
    $region85: #{forward_attention.1} parent=1 // pred_fallthru
      _
    // Predicated region
    $region86: #{forward_attention.1} parent=1 // pred_check
      _
    $region87: #{forward_attention.1} parent=1 // pred_check_branch
      %534 = sbr.rel (0) target = $region89
    $region88: #{forward_attention.1} parent=1 // pred_region
      _
    $region89: #{forward_attention.1} parent=1 // pred_fallthru
      _
    // Predicated region
    $region90: #{forward_attention.1} parent=1 // pred_check
      _
    $region91: #{forward_attention.1} parent=1 // pred_check_branch
      %536 = sbr.rel (0) target = $region93
    $region92: #{forward_attention.1} parent=1 // pred_region
      _
    $region93: #{forward_attention.1} parent=1 // pred_fallthru
      _
    // Predicated region
    $region94: #{forward_attention.1} parent=1 // pred_check
      _
    $region95: #{forward_attention.1} parent=1 // pred_check_branch
      %538 = sbr.rel (0) target = $region97
    $region96: #{forward_attention.1} parent=1 // pred_region
      _
    $region97: #{forward_attention.1} parent=1 // pred_fallthru
      _
    // Predicated region
    $region98: #{forward_attention.1} parent=1 // pred_check
      _
    $region99: #{forward_attention.1} parent=1 // pred_check_branch
      %540 = sbr.rel (0) target = $region101
    $region100: #{forward_attention.1} parent=1 // pred_region
      _
    $region101: #{forward_attention.1} parent=1 // pred_fallthru
      _
    // Predicated region
    $region102: #{forward_attention.1} parent=1 // pred_check
      _
    $region103: #{forward_attention.1} parent=1 // pred_check_branch
      %542 = sbr.rel (0) target = $region105
    $region104: #{forward_attention.1} parent=1 // pred_region
      _
    $region105: #{forward_attention.1} parent=1 // pred_fallthru
      _
    %543 = vsyncpa [#allocation4], 1
    %544 = vsyncpa [#allocation6], 1
    %545 = vsyncpa [#allocation9], 1

</llo_original>
